<compile_context>
chip_gen: v7x
topology: tpu7x:2x2x1
jax: 0.10.0
libtpu: 0.0.40
codegen_flags: <defaults>
</compile_context>

<pallas_src>
import functools

import jax
import jax.numpy as jnp
from jax.experimental import pallas as pl
from jax.experimental.pallas import tpu as pltpu


_OUT_LANES = 128   # lane-dense output slab width (one full vreg lane row)


def _round_up(x, m):
    return (x + m - 1) // m * m


def _actor_critic_kernel(
    x_ref, act_ref,
    w1_ref, b1_ref, w2_ref, b2_ref, w3_ref, b3_ref,
    out_ref,
    *, hidden, n_actions,
):
    H = hidden
    A = n_actions
    f32 = jnp.float32

    x = x_ref[...]                                       # (tm, D)  matmul dtype

    # ---- fused actor/critic trunk: 3 MXU dots total -------------------------
    h1 = jnp.dot(x, w1_ref[...], preferred_element_type=f32) + b1_ref[...]
    lane2h = jax.lax.broadcasted_iota(jnp.int32, h1.shape, 1)
    is_actor = lane2h < H                                # first H lanes = actor
    a1 = jnp.where(is_actor, jnp.maximum(h1, 0.0), jnp.tanh(h1))

    h2 = jnp.dot(a1.astype(w2_ref.dtype), w2_ref[...],
                 preferred_element_type=f32) + b2_ref[...]
    a2 = jnp.where(is_actor, jnp.maximum(h2, 0.0), jnp.tanh(h2))

    h3 = jnp.dot(a2.astype(w3_ref.dtype), w3_ref[...],
                 preferred_element_type=f32) + b3_ref[...]   # (tm, A+1)

    # ---- softmax stats on the A logit lanes; lane A holds the critic value --
    lane = jax.lax.broadcasted_iota(jnp.int32, h3.shape, 1)
    is_logit = lane < A

    z_masked = jnp.where(is_logit, h3, -jnp.inf)
    m = jnp.max(z_masked, axis=-1, keepdims=True)
    e = jnp.where(is_logit, jnp.exp(h3 - m), 0.0)
    s = jnp.sum(e, axis=-1, keepdims=True)
    inv_s = pl.reciprocal(s, approx=False)               # EUP, off the VALU path
    p = e * inv_s                                        # probs (exactly 0 on lane A)
    logp = (h3 - m) - jnp.log(s)                         # log-softmax on logit lanes

    ent = -jnp.sum(p * logp, axis=-1, keepdims=True)     # (tm, 1)

    # log_prob(action): one-hot gather (no dynamic gather on TPU).
    # NOTE: actions outside [0, A) silently yield log_prob = 0.
    act = act_ref[...]                                   # (tm, 1) int32
    onehot = (lane == act).astype(f32)
    lp_a = jnp.sum(onehot * logp, axis=-1, keepdims=True)          # (tm, 1)

    val = jnp.sum(jnp.where(lane == A, h3, 0.0), axis=-1, keepdims=True)  # (tm, 1)

    # ---- pack into one lane-dense slab: cols 0/1/2 = log_prob/value/entropy --
    out_lane = jax.lax.broadcasted_iota(jnp.int32, out_ref.shape, 1)
    out_ref[...] = jnp.where(out_lane == 0, lp_a,
                   jnp.where(out_lane == 1, val,
                   jnp.where(out_lane == 2, ent, 0.0)))


def _fuse_params(params, matmul_dtype):
    """Fold the separate actor / critic layers into three block weights.

      layer1: [w1 | v1]             (D, 2H)     shared input x
      layer2: [[w2, 0], [0, v2]]    (2H, 2H)    block-diagonal
      layer3: [[w3, 0], [0, v3]]    (2H, A+1)   actor logits || critic value
    """
    (w1, b1, w2, b2, w3, b3, v1, c1, v2, c2, v3, c3) = params
    H = w1.shape[1]
    A = w3.shape[1]
    f32 = jnp.float32

    w1f = jnp.concatenate([w1, v1], axis=1)
    b1f = jnp.concatenate([b1, c1], axis=1)

    zHH = jnp.zeros((H, H), f32)
    w2f = jnp.concatenate(
        [jnp.concatenate([w2, zHH], axis=1),
         jnp.concatenate([zHH, v2], axis=1)], axis=0)
    b2f = jnp.concatenate([b2, c2], axis=1)

    w3f = jnp.concatenate(
        [jnp.concatenate([w3, jnp.zeros((H, 1), f32)], axis=1),
         jnp.concatenate([jnp.zeros((H, A), f32), v3], axis=1)], axis=0)
    b3f = jnp.concatenate([b3, c3], axis=1)

    return (w1f.astype(matmul_dtype), b1f.astype(f32),
            w2f.astype(matmul_dtype), b2f.astype(f32),
            w3f.astype(matmul_dtype), b3f.astype(f32), H, A)


def actor_critic_evaluate(state, action, params, *, tm=None,
                          matmul_dtype=jnp.float32):
    """state: [B, 1, N_o, D] f32, action: [B, N_o] int32.

    Returns (log_prob [B,N_o], value [B,N_o], entropy [B,N_o]) in float32.
    """
    state = jnp.squeeze(state, axis=1)                   # [B, N_o, D]
    B, N_o, D = state.shape
    M = B * N_o

    w1f, b1f, w2f, b2f, w3f, b3f, H, A = _fuse_params(params, matmul_dtype)

    # Row tile: large enough to fill the MXU and amortize per-step overhead,
    # capped at 512 rows so VMEM use stays tiny (weights are resident) and a
    # large M keeps a multi-step "parallel" grid (feeds both v7x TensorCores).
    if tm is None:
        tm = min(512, _round_up(M, 8))
    tm = _round_up(tm, 8)
    M_pad = _round_up(M, tm)

    x = state.reshape(M, D).astype(jnp.float32)
    a = action.reshape(M, 1).astype(jnp.int32)
    if M_pad != M:
        # Padded rows produce garbage outputs; they are sliced off below.
        x = jnp.pad(x, ((0, M_pad - M), (0, 0)))
        a = jnp.pad(a, ((0, M_pad - M), (0, 0)))
    x = x.astype(matmul_dtype)

    kernel = functools.partial(_actor_critic_kernel, hidden=H, n_actions=A)

    row_spec = lambda last: pl.BlockSpec((tm, last), lambda i: (i, 0))
    resident = lambda r, c: pl.BlockSpec((r, c), lambda i: (0, 0))  # same block
                                                                    # every step

    out = pl.pallas_call(
        kernel,
        out_shape=jax.ShapeDtypeStruct((M_pad, _OUT_LANES), jnp.float32),
        grid=(M_pad // tm,),
        in_specs=[
            row_spec(D),                                   # x rows
            row_spec(1),                                   # actions
            resident(D, 2 * H), resident(1, 2 * H),        # fused layer 1
            resident(2 * H, 2 * H), resident(1, 2 * H),    # fused layer 2
            resident(2 * H, A + 1), resident(1, A + 1),    # fused heads
        ],
        out_specs=row_spec(_OUT_LANES),
        compiler_params=pltpu.CompilerParams(
            dimension_semantics=("parallel",)),
    )(x, a, w1f, b1f, w2f, b2f, w3f, b3f)

    logp = out[:M, 0].reshape(B, N_o)
    val = out[:M, 1].reshape(B, N_o)
    ent = out[:M, 2].reshape(B, N_o)
    return logp, val, ent


def init_params(key, input_size, hidden_size, action_size):
    """Deterministic synthetic weights, stored [in, out] (x @ W + b)."""
    ks = jax.random.split(key, 12)
    scale = 0.1
    f32 = jnp.float32
    w1 = scale * jax.random.normal(ks[0], (input_size, hidden_size), f32)
    b1 = scale * jax.random.normal(ks[1], (1, hidden_size), f32)
    w2 = scale * jax.random.normal(ks[2], (hidden_size, hidden_size), f32)
    b2 = scale * jax.random.normal(ks[3], (1, hidden_size), f32)
    w3 = scale * jax.random.normal(ks[4], (hidden_size, action_size), f32)
    b3 = scale * jax.random.normal(ks[5], (1, action_size), f32)
    v1 = scale * jax.random.normal(ks[6], (input_size, hidden_size), f32)
    c1 = scale * jax.random.normal(ks[7], (1, hidden_size), f32)
    v2 = scale * jax.random.normal(ks[8], (hidden_size, hidden_size), f32)
    c2 = scale * jax.random.normal(ks[9], (1, hidden_size), f32)
    v3 = scale * jax.random.normal(ks[10], (hidden_size, 1), f32)
    c3 = scale * jax.random.normal(ks[11], (1, 1), f32)
    return (w1, b1, w2, b2, w3, b3, v1, c1, v2, c2, v3, c3)


def _reference(state, action, params):
    """Plain-JAX reference matching the PyTorch evaluate() semantics."""
    (w1, b1, w2, b2, w3, b3, v1, c1, v2, c2, v3, c3) = params
    x = jnp.squeeze(state, axis=1)
    B, N_o, D = x.shape
    xf = x.reshape(-1, D)
    h = jnp.maximum(xf @ w1 + b1, 0.0)
    h = jnp.maximum(h @ w2 + b2, 0.0)
    z = h @ w3 + b3
    logp = jax.nn.log_softmax(z, axis=-1)
    p = jnp.exp(logp)
    ent = -jnp.sum(p * logp, axis=-1).reshape(B, N_o)
    lp_a = jnp.take_along_axis(logp, action.reshape(-1, 1), axis=-1).reshape(B, N_o)
    g = jnp.tanh(xf @ v1 + c1)
    g = jnp.tanh(g @ v2 + c2)
    val = (g @ v3 + c3).reshape(B, N_o)
    return lp_a, val, ent


if __name__ == "__main__":
    key = jax.random.PRNGKey(0)
    k_state, k_act, k_param = jax.random.split(key, 3)

    # Small shapes consistent with the module: input_size = state_r + effect_size.
    B, N_o = 2, 8
    state_r_dim, effect_size = 16, 16
    input_size = state_r_dim + effect_size               # 32
    hidden = 32
    action_dim = 5

    state = jax.random.normal(k_state, (B, 1, N_o, input_size), jnp.float32)
    action = jax.random.randint(k_act, (B, N_o), 0, action_dim, jnp.int32)
    params = init_params(k_param, input_size, hidden, action_dim)

    lp_ref, val_ref, ent_ref = _reference(state, action, params)

    # f32 matmul operands: strict check against the reference.
    logp, value, entropy = actor_critic_evaluate(state, action, params)
    jax.block_until_ready((logp, value, entropy))
    assert jnp.allclose(logp, lp_ref, atol=1e-5), "log_prob mismatch (f32)"
    assert jnp.allclose(value, val_ref, atol=1e-5), "value mismatch (f32)"
    assert jnp.allclose(entropy, ent_ref, atol=1e-5), "entropy mismatch (f32)"

    # bf16 matmul operands (native MXU dtype on v6e/v7x): looser tolerance.
    logp_b, value_b, entropy_b = actor_critic_evaluate(
        state, action, params, matmul_dtype=jnp.bfloat16)
    jax.block_until_ready((logp_b, value_b, entropy_b))
    assert jnp.allclose(logp_b, lp_ref, atol=5e-2), "log_prob mismatch (bf16)"
    assert jnp.allclose(value_b, val_ref, atol=5e-2), "value mismatch (bf16)"
    assert jnp.allclose(entropy_b, ent_ref, atol=5e-2), "entropy mismatch (bf16)"

    # Ragged row count (B*N_o not a multiple of 8): exercises the padding path.
    B2, N2 = 3, 5
    state2 = jax.random.normal(k_state, (B2, 1, N2, input_size), jnp.float32)
    action2 = jax.random.randint(k_act, (B2, N2), 0, action_dim, jnp.int32)
    lp2, v2, e2 = actor_critic_evaluate(state2, action2, params)
    jax.block_until_ready((lp2, v2, e2))
    lp2_r, v2_r, e2_r = _reference(state2, action2, params)
    assert jnp.allclose(lp2, lp2_r, atol=1e-5), "log_prob mismatch (ragged)"
    assert jnp.allclose(v2, v2_r, atol=1e-5), "value mismatch (ragged)"
    assert jnp.allclose(e2, e2_r, atol=1e-5), "entropy mismatch (ragged)"

    print("KERNEL_OK")
</pallas_src>

<mosaic_0001>
module attributes {stable_mosaic.version = 11 : i64} {
  func.func @_actor_critic_kernel(%arg0: i32, %arg1: memref<16x32xf32, #tpu.memory_space<vmem>>, %arg2: memref<16x1xi32, #tpu.memory_space<vmem>>, %arg3: memref<32x64xf32, #tpu.memory_space<vmem>>, %arg4: memref<1x64xf32, #tpu.memory_space<vmem>>, %arg5: memref<64x64xf32, #tpu.memory_space<vmem>>, %arg6: memref<1x64xf32, #tpu.memory_space<vmem>>, %arg7: memref<64x6xf32, #tpu.memory_space<vmem>>, %arg8: memref<1x6xf32, #tpu.memory_space<vmem>>, %arg9: memref<16x128xf32, #tpu.memory_space<vmem>>) attributes {dimension_semantics = [#tpu.dimension_semantics<parallel>], iteration_bounds = array<i64: 1>, scalar_prefetch = 0 : i64, scratch_operands = 0 : i64, tpu.core_type = #tpu.core_type<tc>, window_params = [{transform_indices = @transform_0, window_bounds = array<i64: 16, 32>}, {transform_indices = @transform_1, window_bounds = array<i64: 16, 1>}, {pipeline_mode = #tpu.pipeline_mode<synchronous>, transform_indices = @transform_2, window_bounds = array<i64: 32, 64>}, {pipeline_mode = #tpu.pipeline_mode<synchronous>, transform_indices = @transform_3, window_bounds = array<i64: 1, 64>}, {pipeline_mode = #tpu.pipeline_mode<synchronous>, transform_indices = @transform_4, window_bounds = array<i64: 64, 64>}, {pipeline_mode = #tpu.pipeline_mode<synchronous>, transform_indices = @transform_5, window_bounds = array<i64: 1, 64>}, {pipeline_mode = #tpu.pipeline_mode<synchronous>, transform_indices = @transform_6, window_bounds = array<i64: 64, 6>}, {pipeline_mode = #tpu.pipeline_mode<synchronous>, transform_indices = @transform_7, window_bounds = array<i64: 1, 6>}, {transform_indices = @transform_8, window_bounds = array<i64: 16, 128>}]} {
    %c0 = arith.constant 0 : index
    %c0_0 = arith.constant 0 : index
    %0 = vector.load %arg1[%c0, %c0_0] : memref<16x32xf32, #tpu.memory_space<vmem>>, vector<16x32xf32>
    %c0_1 = arith.constant 0 : index
    %c0_2 = arith.constant 0 : index
    %1 = vector.load %arg3[%c0_1, %c0_2] : memref<32x64xf32, #tpu.memory_space<vmem>>, vector<32x64xf32>
    %cst = arith.constant dense<0.000000e+00> : vector<16x64xf32>
    %2 = tpu.matmul %0, %1, %cst {dimension_numbers = #tpu.dot_dimension_numbers<[1], [0], [0], [1], [0, 0, 1, 1], [], []>} : vector<16x32xf32>, vector<32x64xf32>, vector<16x64xf32> -> vector<16x64xf32>
    %c0_3 = arith.constant 0 : index
    %c0_4 = arith.constant 0 : index
    %3 = vector.load %arg4[%c0_3, %c0_4] : memref<1x64xf32, #tpu.memory_space<vmem>>, vector<1x64xf32>
    %4 = vector.broadcast %3 : vector<1x64xf32> to vector<16x64xf32>
    %5 = arith.addf %2, %4 : vector<16x64xf32>
    %6 = tpu.iota {dimensions = array<i32: 1>} : vector<16x64xi32>
    %c32_i32 = arith.constant 32 : i32
    %7 = vector.broadcast %c32_i32 : i32 to vector<16x64xi32>
    %8 = arith.cmpi slt, %6, %7 : vector<16x64xi32>
    %cst_5 = arith.constant 0.000000e+00 : f32
    %9 = vector.broadcast %cst_5 : f32 to vector<16x64xf32>
    %10 = arith.maximumf %5, %9 : vector<16x64xf32>
    %11 = math.tanh %5 : vector<16x64xf32>
    %12 = arith.select %8, %10, %11 : vector<16x64xi1>, vector<16x64xf32>
    %c0_6 = arith.constant 0 : index
    %c0_7 = arith.constant 0 : index
    %13 = vector.load %arg5[%c0_6, %c0_7] : memref<64x64xf32, #tpu.memory_space<vmem>>, vector<64x64xf32>
    %cst_8 = arith.constant dense<0.000000e+00> : vector<16x64xf32>
    %14 = tpu.matmul %12, %13, %cst_8 {dimension_numbers = #tpu.dot_dimension_numbers<[1], [0], [0], [1], [0, 0, 1, 1], [], []>} : vector<16x64xf32>, vector<64x64xf32>, vector<16x64xf32> -> vector<16x64xf32>
    %c0_9 = arith.constant 0 : index
    %c0_10 = arith.constant 0 : index
    %15 = vector.load %arg6[%c0_9, %c0_10] : memref<1x64xf32, #tpu.memory_space<vmem>>, vector<1x64xf32>
    %16 = vector.broadcast %15 : vector<1x64xf32> to vector<16x64xf32>
    %17 = arith.addf %14, %16 : vector<16x64xf32>
    %cst_11 = arith.constant 0.000000e+00 : f32
    %18 = vector.broadcast %cst_11 : f32 to vector<16x64xf32>
    %19 = arith.maximumf %17, %18 : vector<16x64xf32>
    %20 = math.tanh %17 : vector<16x64xf32>
    %21 = arith.select %8, %19, %20 : vector<16x64xi1>, vector<16x64xf32>
    %c0_12 = arith.constant 0 : index
    %c0_13 = arith.constant 0 : index
    %22 = vector.load %arg7[%c0_12, %c0_13] : memref<64x6xf32, #tpu.memory_space<vmem>>, vector<64x6xf32>
    %cst_14 = arith.constant dense<0.000000e+00> : vector<16x6xf32>
    %23 = tpu.matmul %21, %22, %cst_14 {dimension_numbers = #tpu.dot_dimension_numbers<[1], [0], [0], [1], [0, 0, 1, 1], [], []>} : vector<16x64xf32>, vector<64x6xf32>, vector<16x6xf32> -> vector<16x6xf32>
    %c0_15 = arith.constant 0 : index
    %c0_16 = arith.constant 0 : index
    %24 = vector.load %arg8[%c0_15, %c0_16] : memref<1x6xf32, #tpu.memory_space<vmem>>, vector<1x6xf32>
    %25 = vector.broadcast %24 : vector<1x6xf32> to vector<16x6xf32>
    %26 = arith.addf %23, %25 : vector<16x6xf32>
    %27 = tpu.iota {dimensions = array<i32: 1>} : vector<16x6xi32>
    %c5_i32 = arith.constant 5 : i32
    %28 = vector.broadcast %c5_i32 : i32 to vector<16x6xi32>
    %29 = arith.cmpi slt, %27, %28 : vector<16x6xi32>
    %cst_17 = arith.constant 0xFF800000 : f32
    %30 = vector.broadcast %cst_17 : f32 to vector<16x6xf32>
    %31 = arith.select %29, %26, %30 : vector<16x6xi1>, vector<16x6xf32>
    %cst_18 = arith.constant dense<0xFF800000> : vector<16xf32>
    %32 = vector.multi_reduction <maximumf>, %31, %cst_18 [1] : vector<16x6xf32> to vector<16xf32>
    %33 = vector.shape_cast %32 : vector<16xf32> to vector<16x1xf32>
    %34 = vector.broadcast %33 : vector<16x1xf32> to vector<16x6xf32>
    %35 = arith.subf %26, %34 : vector<16x6xf32>
    %36 = math.exp %35 : vector<16x6xf32>
    %cst_19 = arith.constant 0.000000e+00 : f32
    %37 = vector.broadcast %cst_19 : f32 to vector<16x6xf32>
    %38 = arith.select %29, %36, %37 : vector<16x6xi1>, vector<16x6xf32>
    %cst_20 = arith.constant dense<0.000000e+00> : vector<16xf32>
    %39 = vector.multi_reduction <add>, %38, %cst_20 [1] : vector<16x6xf32> to vector<16xf32>
    %40 = vector.shape_cast %39 : vector<16xf32> to vector<16x1xf32>
    %41 = tpu.reciprocal %40 : vector<16x1xf32> -> vector<16x1xf32>
    %42 = vector.broadcast %41 : vector<16x1xf32> to vector<16x6xf32>
    %43 = arith.mulf %38, %42 : vector<16x6xf32>
    %44 = vector.broadcast %33 : vector<16x1xf32> to vector<16x6xf32>
    %45 = arith.subf %26, %44 : vector<16x6xf32>
    %46 = math.log %40 : vector<16x1xf32>
    %47 = vector.broadcast %46 : vector<16x1xf32> to vector<16x6xf32>
    %48 = arith.subf %45, %47 : vector<16x6xf32>
    %49 = arith.mulf %43, %48 : vector<16x6xf32>
    %cst_21 = arith.constant dense<0.000000e+00> : vector<16xf32>
    %50 = vector.multi_reduction <add>, %49, %cst_21 [1] : vector<16x6xf32> to vector<16xf32>
    %51 = vector.shape_cast %50 : vector<16xf32> to vector<16x1xf32>
    %cst_22 = arith.constant 0.000000e+00 : f32
    %52 = vector.broadcast %cst_22 : f32 to vector<16x1xf32>
    %53 = arith.subf %52, %51 : vector<16x1xf32>
    %c0_23 = arith.constant 0 : index
    %c0_24 = arith.constant 0 : index
    %54 = vector.load %arg2[%c0_23, %c0_24] : memref<16x1xi32, #tpu.memory_space<vmem>>, vector<16x1xi32>
    %55 = vector.broadcast %54 : vector<16x1xi32> to vector<16x6xi32>
    %56 = arith.cmpi eq, %27, %55 : vector<16x6xi32>
    %57 = arith.extui %56 : vector<16x6xi1> to vector<16x6xi32>
    %58 = arith.sitofp %57 : vector<16x6xi32> to vector<16x6xf32>
    %59 = arith.mulf %58, %48 : vector<16x6xf32>
    %cst_25 = arith.constant dense<0.000000e+00> : vector<16xf32>
    %60 = vector.multi_reduction <add>, %59, %cst_25 [1] : vector<16x6xf32> to vector<16xf32>
    %61 = vector.shape_cast %60 : vector<16xf32> to vector<16x1xf32>
    %c5_i32_26 = arith.constant 5 : i32
    %62 = vector.broadcast %c5_i32_26 : i32 to vector<16x6xi32>
    %63 = arith.cmpi eq, %27, %62 : vector<16x6xi32>
    %cst_27 = arith.constant 0.000000e+00 : f32
    %64 = vector.broadcast %cst_27 : f32 to vector<16x6xf32>
    %65 = arith.select %63, %26, %64 : vector<16x6xi1>, vector<16x6xf32>
    %cst_28 = arith.constant dense<0.000000e+00> : vector<16xf32>
    %66 = vector.multi_reduction <add>, %65, %cst_28 [1] : vector<16x6xf32> to vector<16xf32>
    %67 = vector.shape_cast %66 : vector<16xf32> to vector<16x1xf32>
    %68 = tpu.iota {dimensions = array<i32: 1>} : vector<16x128xi32>
    %c0_i32 = arith.constant 0 : i32
    %69 = vector.broadcast %c0_i32 : i32 to vector<16x128xi32>
    %70 = arith.cmpi eq, %68, %69 : vector<16x128xi32>
    %c1_i32 = arith.constant 1 : i32
    %71 = vector.broadcast %c1_i32 : i32 to vector<16x128xi32>
    %72 = arith.cmpi eq, %68, %71 : vector<16x128xi32>
    %c2_i32 = arith.constant 2 : i32
    %73 = vector.broadcast %c2_i32 : i32 to vector<16x128xi32>
    %74 = arith.cmpi eq, %68, %73 : vector<16x128xi32>
    %cst_29 = arith.constant 0.000000e+00 : f32
    %75 = vector.shape_cast %53 : vector<16x1xf32> to vector<16x1xf32>
    %76 = vector.broadcast %75 : vector<16x1xf32> to vector<16x128xf32>
    %77 = vector.broadcast %cst_29 : f32 to vector<16x128xf32>
    %78 = arith.select %74, %76, %77 : vector<16x128xi1>, vector<16x128xf32>
    %79 = vector.shape_cast %67 : vector<16x1xf32> to vector<16x1xf32>
    %80 = vector.broadcast %79 : vector<16x1xf32> to vector<16x128xf32>
    %81 = arith.select %72, %80, %78 : vector<16x128xi1>, vector<16x128xf32>
    %82 = vector.shape_cast %61 : vector<16x1xf32> to vector<16x1xf32>
    %83 = vector.broadcast %82 : vector<16x1xf32> to vector<16x128xf32>
    %84 = arith.select %70, %83, %81 : vector<16x128xi1>, vector<16x128xf32>
    %c0_30 = arith.constant 0 : index
    %c0_31 = arith.constant 0 : index
    %85 = vector.load %arg9[%c0_30, %c0_31] : memref<16x128xf32, #tpu.memory_space<vmem>>, vector<16x128xf32>
    tpu.vector_store %arg9[%c0_30, %c0_31], %84 {strides = array<i32>} : memref<16x128xf32, #tpu.memory_space<vmem>>, vector<16x128xf32>,
    return
  }
  func.func @transform_0(%arg0: i32) -> (i32, i32) {
    %c0_i32 = arith.constant 0 : i32
    %c0_i32_0 = arith.constant 0 : i32
    return %arg0, %c0_i32 : i32, i32
  }
  func.func @transform_1(%arg0: i32) -> (i32, i32) {
    %c0_i32 = arith.constant 0 : i32
    %c0_i32_0 = arith.constant 0 : i32
    return %arg0, %c0_i32 : i32, i32
  }
  func.func @transform_2(%arg0: i32) -> (i32, i32) {
    %c0_i32 = arith.constant 0 : i32
    %c0_i32_0 = arith.constant 0 : i32
    %c0_i32_1 = arith.constant 0 : i32
    return %c0_i32, %c0_i32_0 : i32, i32
  }
  func.func @transform_3(%arg0: i32) -> (i32, i32) {
    %c0_i32 = arith.constant 0 : i32
    %c0_i32_0 = arith.constant 0 : i32
    %c0_i32_1 = arith.constant 0 : i32
    return %c0_i32, %c0_i32_0 : i32, i32
  }
  func.func @transform_4(%arg0: i32) -> (i32, i32) {
    %c0_i32 = arith.constant 0 : i32
    %c0_i32_0 = arith.constant 0 : i32
    %c0_i32_1 = arith.constant 0 : i32
    return %c0_i32, %c0_i32_0 : i32, i32
  }
  func.func @transform_5(%arg0: i32) -> (i32, i32) {
    %c0_i32 = arith.constant 0 : i32
    %c0_i32_0 = arith.constant 0 : i32
    %c0_i32_1 = arith.constant 0 : i32
    return %c0_i32, %c0_i32_0 : i32, i32
  }
  func.func @transform_6(%arg0: i32) -> (i32, i32) {
    %c0_i32 = arith.constant 0 : i32
    %c0_i32_0 = arith.constant 0 : i32
    %c0_i32_1 = arith.constant 0 : i32
    return %c0_i32, %c0_i32_0 : i32, i32
  }
  func.func @transform_7(%arg0: i32) -> (i32, i32) {
    %c0_i32 = arith.constant 0 : i32
    %c0_i32_0 = arith.constant 0 : i32
    %c0_i32_1 = arith.constant 0 : i32
    return %c0_i32, %c0_i32_0 : i32, i32
  }
  func.func @transform_8(%arg0: i32) -> (i32, i32) {
    %c0_i32 = arith.constant 0 : i32
    %c0_i32_0 = arith.constant 0 : i32
    return %arg0, %c0_i32 : i32, i32
  }
}

</mosaic_0001>

<llo_original>
// kernel: tpu_custom_call.1
$region0: #{tpu_custom_call.1}
  #allocation0 [shape = 'u32[]', space=smem, size = 0x4, offset = 0x4, fixed_abs, tag = 'smem constant byte address 0x4 - core index']
  #allocation1 [shape = 'u32[144,128]{1,0:T(1,128)}', space=vmem, size = 0x12000, scoped, tag = 'internal scratch']
  %s0 = inlined_call_operand.hbm [shape: f32[16,32], index: 0, kind: input, shape index: {}]
  %s1 = inlined_call_operand.vmem [shape: s32[16,1], index: 1, kind: input, shape index: {}]
  %s2 = inlined_call_operand.vmem [shape: f32[32,64], index: 2, kind: input, shape index: {}]
  %s3 = inlined_call_operand.vmem [shape: f32[1,64], index: 3, kind: input, shape index: {}]
  %s4 = inlined_call_operand.vmem [shape: f32[64,64], index: 4, kind: input, shape index: {}]
  %s5 = inlined_call_operand.vmem [shape: f32[1,64], index: 5, kind: input, shape index: {}]
  %s6 = inlined_call_operand.vmem [shape: f32[64,6], index: 6, kind: input, shape index: {}]
  %s7 = inlined_call_operand.vmem [shape: f32[1,6], index: 7, kind: input, shape index: {}]
  %s8 = inlined_call_operand.hbm [shape: f32[16,128], index: 8, kind: output, shape index: {}]
  %s9 = sld [smem:[#allocation0]]
  $region46: #{tpu_custom_call.1} parent=0
    _
  %s11 = ssub.s32 1, %s9
  %s12 = scalar_select 0, %s11, %s9
  $region1: #{tpu_custom_call.1} parent=0
    #allocation2 [shape = 'u8[8192]{0}', space=vmem, size = 0x2000, scoped, tag = 'input window, operand 0, single buffered']
    #allocation3 [shape = 's32[1]{0}', space=sflag, size = 0x4, scoped, tag = 'scoped memory for tpu_custom_call.1']
    #allocation4 [shape = 's32[1]{0}', space=sflag, size = 0x4, scoped, tag = 'scoped memory for tpu_custom_call.1']
    #allocation5 [shape = 'u8[8192]{0}', space=vmem, size = 0x2000, scoped, tag = 'output window, operand 0, single buffered']
    %13 = vsyncpa [#allocation3], 0
    %14 = vsyncpa [#allocation4], 0
    // Predicated region
    $region2: #{tpu_custom_call.1} parent=1 // pred_check
      _
    $region3: #{tpu_custom_call.1} parent=1 // pred_check_branch
      %16 = sbr.rel (0) target = $region5
    $region4: #{tpu_custom_call.1} parent=1 // pred_region
      %s18 = ssub.s32 256, 256
      %19 = vsyncadd [#allocation3], %s18
      %s20 = sshll.u32 [#allocation2], 4
      %s21 = int_to_ptr.vmem [resolvable:$true] %s20
      %26 = dma.hbm_to_vmem [thread:$0]  %s0, 256, %s21, [#allocation3], 128, 128, 8
    $region5: #{tpu_custom_call.1} parent=1 // pred_fallthru
      _
    // Predicated region
    $region6: #{tpu_custom_call.1} parent=1 // pred_check
      _
    $region7: #{tpu_custom_call.1} parent=1 // pred_check_branch
      %28 = sbr.rel (0) target = $region9
    $region8: #{tpu_custom_call.1} parent=1 // pred_region
      _
    $region9: #{tpu_custom_call.1} parent=1 // pred_fallthru
      _
    // Predicated region
    $region10: #{tpu_custom_call.1} parent=1 // pred_check
      _
    $region11: #{tpu_custom_call.1} parent=1 // pred_check_branch
      %30 = sbr.rel (0) target = $region13
    $region12: #{tpu_custom_call.1} parent=1 // pred_region
      _
    $region13: #{tpu_custom_call.1} parent=1 // pred_fallthru
      _
    // Predicated region
    $region14: #{tpu_custom_call.1} parent=1 // pred_check
      _
    $region15: #{tpu_custom_call.1} parent=1 // pred_check_branch
      %32 = sbr.rel (0) target = $region17
    $region16: #{tpu_custom_call.1} parent=1 // pred_region
      _
    $region17: #{tpu_custom_call.1} parent=1 // pred_fallthru
      _
    // Predicated region
    $region18: #{tpu_custom_call.1} parent=1 // pred_check
      _
    $region19: #{tpu_custom_call.1} parent=1 // pred_check_branch
      %34 = sbr.rel (0) target = $region21
    $region20: #{tpu_custom_call.1} parent=1 // pred_region
      _
    $region21: #{tpu_custom_call.1} parent=1 // pred_fallthru
      _
    // Predicated region
    $region22: #{tpu_custom_call.1} parent=1 // pred_check
      _
    $region23: #{tpu_custom_call.1} parent=1 // pred_check_branch
      %36 = sbr.rel (0) target = $region25
    $region24: #{tpu_custom_call.1} parent=1 // pred_region
      _
    $region25: #{tpu_custom_call.1} parent=1 // pred_fallthru
      _
    // Predicated region
    $region26: #{tpu_custom_call.1} parent=1 // pred_check
      _
    $region27: #{tpu_custom_call.1} parent=1 // pred_check_branch
      %38 = sbr.rel (0) target = $region29
    $region28: #{tpu_custom_call.1} parent=1 // pred_region
      _
    $region29: #{tpu_custom_call.1} parent=1 // pred_fallthru
      _
    // Predicated region
    $region30: #{tpu_custom_call.1} parent=1 // pred_check
      _
    $region31: #{tpu_custom_call.1} parent=1 // pred_check_branch
      %40 = sbr.rel (0) target = $region33
    $region32: #{tpu_custom_call.1} parent=1 // pred_region
      _
    $region33: #{tpu_custom_call.1} parent=1 // pred_fallthru
      _
    // Predicated region
    $region34: #{tpu_custom_call.1} parent=1 // pred_check
      _
    $region35: #{tpu_custom_call.1} parent=1 // pred_check_branch
      %42 = sbr.rel (0) target = $region37
    $region36: #{tpu_custom_call.1} parent=1 // pred_region
      %43 = dma.done [#allocation3], 256
    $region37: #{tpu_custom_call.1} parent=1 // pred_fallthru
      _
    %v44 = vld [vmem:[#allocation2] sm:$0xff]
    %v45 = vld [vmem:[#allocation2 + $0x8] sm:$0xff]
    %v46 = vld [vmem:[%s2] sm:$0xff]
    %v47 = vld [vmem:[%s2 + $0x8] sm:$0xff]
    %v48 = vld [vmem:[%s2 + $0x10] sm:$0xff]
    %v49 = vld [vmem:[%s2 + $0x18] sm:$0xff]
    %v50 = vld [vmem:[%s3] sm:$0x1]
    %v52 = vlaneseq
    %v53 = vshrl.u32 %v52, 7
    %v54 = vsub.s32 0, %v53
    %v55 = vrot.slane %v50, %v54
    %vm57 = vcmask 261120
    %v59 = vsel %vm57, %v44, 0
    %v62 = vsel %vm57, %v45, 0
    %64 = vmatprep.subr.mxu0 0.0
    %65 = vmatpush1.msra.mxu0 %v46
    %66 = vmatprep.subr.mxu0 0.0
    %67 = vmatpush1.msra.mxu0 %v47
    %68 = vmatprep.subr.mxu0 0.0
    %69 = vmatpush1.msra.mxu0 %v48
    %70 = vmatprep.subr.mxu0 0.0
    %71 = vmatpush1.msra.mxu0 %v49
    %72 = vmatprep.subr.mxu0 0.0
    %73 = vmatpush1.msra.mxu0 0.0
    %74 = vmatprep.subr.mxu0 0.0
    %75 = vmatpush1.msra.mxu0 0.0
    %76 = vmatprep.subr.mxu0 0.0
    %77 = vmatpush1.msra.mxu0 0.0
    %78 = vmatprep.subr.mxu0 0.0
    %79 = vmatpush1.msra.mxu0 0.0
    %80 = vmatprep.subr.mxu0 0.0
    %81 = vmatpush1.msra.mxu0 0.0
    %82 = vmatprep.subr.mxu0 0.0
    %83 = vmatpush1.msra.mxu0 0.0
    %84 = vmatprep.subr.mxu0 0.0
    %85 = vmatpush1.msra.mxu0 0.0
    %86 = vmatprep.subr.mxu0 0.0
    %87 = vmatpush1.msra.mxu0 0.0
    %88 = vmatprep.subr.mxu0 0.0
    %89 = vmatpush1.msra.mxu0 0.0
    %90 = vmatprep.subr.mxu0 0.0
    %91 = vmatpush1.msra.mxu0 0.0
    %92 = vmatprep.subr.mxu0 0.0
    %93 = vmatpush1.msra.mxu0 0.0
    %94 = vmatprep.subr.mxu0 0.0
    %95 = vmatpush1.msra.mxu0 0.0
    %96 = vmatprep.subr.mxu0 0.0
    %97 = vmatpush1.msra.mxu0 0.0
    %98 = vmatprep.subr.mxu0 0.0
    %99 = vmatpush1.msra.mxu0 0.0
    %100 = vmatprep.subr.mxu0 0.0
    %101 = vmatpush1.msra.mxu0 0.0
    %102 = vmatprep.subr.mxu0 0.0
    %103 = vmatpush1.msra.mxu0 0.0
    %104 = vmatprep.subr.mxu0 0.0
    %105 = vmatpush1.msra.mxu0 0.0
    %106 = vmatprep.subr.mxu0 0.0
    %107 = vmatpush1.msra.mxu0 0.0
    %108 = vmatprep.subr.mxu0 0.0
    %109 = vmatpush1.msra.mxu0 0.0
    %110 = vmatprep.subr.mxu0 0.0
    %111 = vmatpush1.msra.mxu0 0.0
    %112 = vmatprep.subr.mxu0 0.0
    %113 = vmatpush1.msra.mxu0 0.0
    %114 = vmatprep.subr.mxu0 0.0
    %115 = vmatpush1.msra.mxu0 0.0
    %116 = vmatprep.subr.mxu0 0.0
    %117 = vmatpush1.msra.mxu0 0.0
    %118 = vmatprep.subr.mxu0 0.0
    %119 = vmatpush1.msra.mxu0 0.0
    %120 = vmatprep.subr.mxu0 0.0
    %121 = vmatpush1.msra.mxu0 0.0
    %122 = vmatprep.subr.mxu0 0.0
    %123 = vmatpush1.msra.mxu0 0.0
    %124 = vmatprep.subr.mxu0 0.0
    %125 = vmatpush1.msra.mxu0 0.0
    %126 = vmatprep.subr.mxu0 0.0
    %127 = vmatpush1.msra.mxu0 0.0
    %128 = vmatprep.mubr.f32.mxu0 0.0
    %129 = vmatmul.mubr.f32.gmra.mrb[0].mxu0 %v59
    %v130 = vpop.f32.mrb[0].mxu0
    %v131 = vadd.f32 %v55, %v130
    %v132 = vpop.f32.mrb[0].mxu0
    %133 = vmatprep.mubr.f32.mxu0 0.0
    %134 = vmatmul.mubr.f32.gmra.mrb[0].mxu0 %v62
    %v135 = vpop.f32.mrb[0].mxu0
    %v136 = vadd.f32 %v55, %v135
    %v137 = vpop.f32.mrb[0].mxu0
    %138 = vdwg.mxu0
    %v139 = vlaneseq
    %v140 = vand.u32 %v139, 127
    %vm141 = vcmp.lt.s32.totalorder %v140, 32
    %v142 = vmax.f32 %v131, 0.0
    %v143 = vmax.f32 %v136, 0.0
    %v144 = vtanh.pop %v131
    %v145 = vtanh.pop %v136
    %v146 = vsel %vm141, %v142, %v144
    %v147 = vsel %vm141, %v143, %v145
    %v148 = vld [vmem:[%s4] sm:$0xff]
    %v149 = vld [vmem:[%s4 + $0x8] sm:$0xff]
    %v150 = vld [vmem:[%s4 + $0x10] sm:$0xff]
    %v151 = vld [vmem:[%s4 + $0x18] sm:$0xff]
    %v152 = vld [vmem:[%s4 + $0x20] sm:$0xff]
    %v153 = vld [vmem:[%s4 + $0x28] sm:$0xff]
    %v154 = vld [vmem:[%s4 + $0x30] sm:$0xff]
    %v155 = vld [vmem:[%s4 + $0x38] sm:$0xff]
    %v156 = vld [vmem:[%s5] sm:$0x1]
    %v158 = vlaneseq
    %v159 = vshrl.u32 %v158, 7
    %v160 = vsub.s32 0, %v159
    %v161 = vrot.slane %v156, %v160
    %vm163 = vcmask 523264
    %v165 = vsel %vm163, %v146, 0
    %v168 = vsel %vm163, %v147, 0
    %170 = vmatprep.subr.mxu0 0.0
    %171 = vmatpush1.msra.mxu0 %v148
    %172 = vmatprep.subr.mxu0 0.0
    %173 = vmatpush1.msra.mxu0 %v149
    %174 = vmatprep.subr.mxu0 0.0
    %175 = vmatpush1.msra.mxu0 %v150
    %176 = vmatprep.subr.mxu0 0.0
    %177 = vmatpush1.msra.mxu0 %v151
    %178 = vmatprep.subr.mxu0 0.0
    %179 = vmatpush1.msra.mxu0 %v152
    %180 = vmatprep.subr.mxu0 0.0
    %181 = vmatpush1.msra.mxu0 %v153
    %182 = vmatprep.subr.mxu0 0.0
    %183 = vmatpush1.msra.mxu0 %v154
    %184 = vmatprep.subr.mxu0 0.0
    %185 = vmatpush1.msra.mxu0 %v155
    %186 = vmatprep.subr.mxu0 0.0
    %187 = vmatpush1.msra.mxu0 0.0
    %188 = vmatprep.subr.mxu0 0.0
    %189 = vmatpush1.msra.mxu0 0.0
    %190 = vmatprep.subr.mxu0 0.0
    %191 = vmatpush1.msra.mxu0 0.0
    %192 = vmatprep.subr.mxu0 0.0
    %193 = vmatpush1.msra.mxu0 0.0
    %194 = vmatprep.subr.mxu0 0.0
    %195 = vmatpush1.msra.mxu0 0.0
    %196 = vmatprep.subr.mxu0 0.0
    %197 = vmatpush1.msra.mxu0 0.0
    %198 = vmatprep.subr.mxu0 0.0
    %199 = vmatpush1.msra.mxu0 0.0
    %200 = vmatprep.subr.mxu0 0.0
    %201 = vmatpush1.msra.mxu0 0.0
    %202 = vmatprep.subr.mxu0 0.0
    %203 = vmatpush1.msra.mxu0 0.0
    %204 = vmatprep.subr.mxu0 0.0
    %205 = vmatpush1.msra.mxu0 0.0
    %206 = vmatprep.subr.mxu0 0.0
    %207 = vmatpush1.msra.mxu0 0.0
    %208 = vmatprep.subr.mxu0 0.0
    %209 = vmatpush1.msra.mxu0 0.0
    %210 = vmatprep.subr.mxu0 0.0
    %211 = vmatpush1.msra.mxu0 0.0
    %212 = vmatprep.subr.mxu0 0.0
    %213 = vmatpush1.msra.mxu0 0.0
    %214 = vmatprep.subr.mxu0 0.0
    %215 = vmatpush1.msra.mxu0 0.0
    %216 = vmatprep.subr.mxu0 0.0
    %217 = vmatpush1.msra.mxu0 0.0
    %218 = vmatprep.subr.mxu0 0.0
    %219 = vmatpush1.msra.mxu0 0.0
    %220 = vmatprep.subr.mxu0 0.0
    %221 = vmatpush1.msra.mxu0 0.0
    %222 = vmatprep.subr.mxu0 0.0
    %223 = vmatpush1.msra.mxu0 0.0
    %224 = vmatprep.subr.mxu0 0.0
    %225 = vmatpush1.msra.mxu0 0.0
    %226 = vmatprep.subr.mxu0 0.0
    %227 = vmatpush1.msra.mxu0 0.0
    %228 = vmatprep.subr.mxu0 0.0
    %229 = vmatpush1.msra.mxu0 0.0
    %230 = vmatprep.subr.mxu0 0.0
    %231 = vmatpush1.msra.mxu0 0.0
    %232 = vmatprep.subr.mxu0 0.0
    %233 = vmatpush1.msra.mxu0 0.0
    %234 = vmatprep.mubr.f32.mxu0 0.0
    %235 = vmatmul.mubr.f32.gmra.mrb[0].mxu0 %v165
    %v236 = vpop.f32.mrb[0].mxu0
    %v237 = vadd.f32 %v161, %v236
    %v238 = vpop.f32.mrb[0].mxu0
    %239 = vmatprep.mubr.f32.mxu0 0.0
    %240 = vmatmul.mubr.f32.gmra.mrb[0].mxu0 %v168
    %v241 = vpop.f32.mrb[0].mxu0
    %v242 = vadd.f32 %v161, %v241
    %v243 = vpop.f32.mrb[0].mxu0
    %244 = vdwg.mxu0
    %v245 = vmax.f32 %v237, 0.0
    %v246 = vmax.f32 %v242, 0.0
    %v247 = vtanh.pop %v237
    %v248 = vtanh.pop %v242
    %v249 = vsel %vm141, %v245, %v247
    %v250 = vsel %vm141, %v246, %v248
    %v251 = vld [vmem:[%s6] sm:$0xff]
    %v252 = vld [vmem:[%s6 + $0x8] sm:$0xff]
    %v253 = vld [vmem:[%s6 + $0x10] sm:$0xff]
    %v254 = vld [vmem:[%s6 + $0x18] sm:$0xff]
    %v255 = vld [vmem:[%s6 + $0x20] sm:$0xff]
    %v256 = vld [vmem:[%s6 + $0x28] sm:$0xff]
    %v257 = vld [vmem:[%s6 + $0x30] sm:$0xff]
    %v258 = vld [vmem:[%s6 + $0x38] sm:$0xff]
    %v259 = vld [vmem:[%s7] sm:$0x1]
    %v261 = vlaneseq
    %v262 = vshrl.u32 %v261, 7
    %v263 = vsub.s32 0, %v262
    %v264 = vrot.slane %v259, %v263
    %v267 = vsel %vm163, %v249, 0
    %v270 = vsel %vm163, %v250, 0
    %272 = vmatprep.subr.mxu0 0.0
    %273 = vmatpush1.msra.mxu0 %v251
    %274 = vmatprep.subr.mxu0 0.0
    %275 = vmatpush1.msra.mxu0 %v252
    %276 = vmatprep.subr.mxu0 0.0
    %277 = vmatpush1.msra.mxu0 %v253
    %278 = vmatprep.subr.mxu0 0.0
    %279 = vmatpush1.msra.mxu0 %v254
    %280 = vmatprep.subr.mxu0 0.0
    %281 = vmatpush1.msra.mxu0 %v255
    %282 = vmatprep.subr.mxu0 0.0
    %283 = vmatpush1.msra.mxu0 %v256
    %284 = vmatprep.subr.mxu0 0.0
    %285 = vmatpush1.msra.mxu0 %v257
    %286 = vmatprep.subr.mxu0 0.0
    %287 = vmatpush1.msra.mxu0 %v258
    %288 = vmatprep.subr.mxu0 0.0
    %289 = vmatpush1.msra.mxu0 0.0
    %290 = vmatprep.subr.mxu0 0.0
    %291 = vmatpush1.msra.mxu0 0.0
    %292 = vmatprep.subr.mxu0 0.0
    %293 = vmatpush1.msra.mxu0 0.0
    %294 = vmatprep.subr.mxu0 0.0
    %295 = vmatpush1.msra.mxu0 0.0
    %296 = vmatprep.subr.mxu0 0.0
    %297 = vmatpush1.msra.mxu0 0.0
    %298 = vmatprep.subr.mxu0 0.0
    %299 = vmatpush1.msra.mxu0 0.0
    %300 = vmatprep.subr.mxu0 0.0
    %301 = vmatpush1.msra.mxu0 0.0
    %302 = vmatprep.subr.mxu0 0.0
    %303 = vmatpush1.msra.mxu0 0.0
    %304 = vmatprep.subr.mxu0 0.0
    %305 = vmatpush1.msra.mxu0 0.0
    %306 = vmatprep.subr.mxu0 0.0
    %307 = vmatpush1.msra.mxu0 0.0
    %308 = vmatprep.subr.mxu0 0.0
    %309 = vmatpush1.msra.mxu0 0.0
    %310 = vmatprep.subr.mxu0 0.0
    %311 = vmatpush1.msra.mxu0 0.0
    %312 = vmatprep.subr.mxu0 0.0
    %313 = vmatpush1.msra.mxu0 0.0
    %314 = vmatprep.subr.mxu0 0.0
    %315 = vmatpush1.msra.mxu0 0.0
    %316 = vmatprep.subr.mxu0 0.0
    %317 = vmatpush1.msra.mxu0 0.0
    %318 = vmatprep.subr.mxu0 0.0
    %319 = vmatpush1.msra.mxu0 0.0
    %320 = vmatprep.subr.mxu0 0.0
    %321 = vmatpush1.msra.mxu0 0.0
    %322 = vmatprep.subr.mxu0 0.0
    %323 = vmatpush1.msra.mxu0 0.0
    %324 = vmatprep.subr.mxu0 0.0
    %325 = vmatpush1.msra.mxu0 0.0
    %326 = vmatprep.subr.mxu0 0.0
    %327 = vmatpush1.msra.mxu0 0.0
    %328 = vmatprep.subr.mxu0 0.0
    %329 = vmatpush1.msra.mxu0 0.0
    %330 = vmatprep.subr.mxu0 0.0
    %331 = vmatpush1.msra.mxu0 0.0
    %332 = vmatprep.subr.mxu0 0.0
    %333 = vmatpush1.msra.mxu0 0.0
    %334 = vmatprep.subr.mxu0 0.0
    %335 = vmatpush1.msra.mxu0 0.0
    %336 = vmatprep.mubr.f32.mxu0 0.0
    %337 = vmatmul.mubr.f32.gmra.mrb[0].mxu0 %v267
    %v338 = vpop.f32.mrb[0].mxu0
    %v339 = vadd.f32 %v264, %v338
    %v340 = vpop.f32.mrb[0].mxu0
    %341 = vmatprep.mubr.f32.mxu0 0.0
    %342 = vmatmul.mubr.f32.gmra.mrb[0].mxu0 %v270
    %v343 = vpop.f32.mrb[0].mxu0
    %v344 = vadd.f32 %v264, %v343
    %v345 = vpop.f32.mrb[0].mxu0
    %346 = vdwg.mxu0
    %vm347 = vcmp.lt.s32.totalorder %v140, 5
    %v348 = vsel %vm347, %v339, -inf
    %v349 = vsel %vm347, %v344, -inf
    %vm350 = vcmask 48128
    %v351 = vsel %vm350, %v348, -inf
    %352 = vmax.xlane.f32.xlu0 %v351
    %v353 = vpop.xlane.xlu0 %352
    %v354 = vsel %vm350, %v349, -inf
    %355 = vmax.xlane.f32.xlu0 %v354
    %v356 = vpop.xlane.xlu0 %355
    %v357 = vsub.f32 %v339, %v353
    %v358 = vsub.f32 %v344, %v356
    %v359 = vmul.f32 %v357, 1.442695
    %v360 = vpow.pop %v359
    %v361 = vmul.f32 %v358, 1.442695
    %v362 = vpow.pop %v361
    %v363 = vsel %vm347, %v360, 0.0
    %v364 = vsel %vm347, %v362, 0.0
    %v365 = vsel %vm350, %v363, 0.0
    %366 = vadd.xlane.f32.xlu0 %v365
    %v367 = vpop.xlane.xlu0 %366
    %v368 = vsel %vm350, %v364, 0.0
    %369 = vadd.xlane.f32.xlu0 %v368
    %v370 = vpop.xlane.xlu0 %369
    %v371 = vrcp.pop %v367
    %v372 = vrcp.pop %v370
    %v373 = vmul.f32 %v363, %v371
    %v374 = vmul.f32 %v364, %v372
    %v375 = vlog2.pop %v367
    %v376 = vmul.f32 %v375, 0.6931472
    %v377 = vlog2.pop %v370
    %v378 = vmul.f32 %v377, 0.6931472
    %v379 = vsub.f32 %v357, %v376
    %v380 = vsub.f32 %v358, %v378
    %v381 = vmul.f32 %v373, %v379
    %v382 = vmul.f32 %v374, %v380
    %v383 = vsel %vm350, %v381, 0.0
    %384 = vadd.xlane.f32.xlu0 %v383
    %v385 = vpop.xlane.xlu0 %384
    %v386 = vsel %vm350, %v382, 0.0
    %387 = vadd.xlane.f32.xlu0 %v386
    %v388 = vpop.xlane.xlu0 %387
    %v389 = vsub.f32 0.0, %v385
    %v390 = vsub.f32 0.0, %v388
    %v391 = vld [vmem:[%s1] sm:$0xff]
    %v392 = vld [vmem:[%s1 + $0x8] sm:$0xff]
    %393 = vset.pattern.permute.xlu0 0
    %394 = vperm.xlu0 %393, %v391
    %v395 = vpop.permute.xlu0 %394
    %396 = vset.pattern.permute.xlu0 0
    %397 = vperm.xlu0 %396, %v392
    %v398 = vpop.permute.xlu0 %397
    %vm399 = vcmp.eq.s32.totalorder %v140, %v395
    %vm400 = vcmp.eq.s32.totalorder %v140, %v398
    %v401 = vsel %vm399, 1, 0
    %v402 = vsel %vm400, 1, 0
    %v403 = vcvt.s32.f32 %v401
    %v404 = vcvt.s32.f32 %v402
    %v405 = vmul.f32 %v403, %v379
    %v406 = vmul.f32 %v404, %v380
    %v407 = vsel %vm350, %v405, 0.0
    %408 = vadd.xlane.f32.xlu0 %v407
    %v409 = vpop.xlane.xlu0 %408
    %v410 = vsel %vm350, %v406, 0.0
    %411 = vadd.xlane.f32.xlu0 %v410
    %v412 = vpop.xlane.xlu0 %411
    %vm413 = vcmp.eq.s32.totalorder %v140, 5
    %v414 = vsel %vm413, %v339, 0.0
    %v415 = vsel %vm413, %v344, 0.0
    %v416 = vsel %vm350, %v414, 0.0
    %417 = vadd.xlane.f32.xlu0 %v416
    %v418 = vpop.xlane.xlu0 %417
    %v419 = vsel %vm350, %v415, 0.0
    %420 = vadd.xlane.f32.xlu0 %v419
    %v421 = vpop.xlane.xlu0 %420
    %vm422 = vcmp.eq.s32.totalorder %v140, 0
    %vm423 = vcmp.eq.s32.totalorder %v140, 1
    %vm424 = vcmp.eq.s32.totalorder %v140, 2
    %v425 = vsel %vm424, %v389, 0.0
    %v426 = vsel %vm424, %v390, 0.0
    %v427 = vsel %vm423, %v418, %v425
    %v428 = vsel %vm423, %v421, %v426
    %v429 = vsel %vm422, %v409, %v427
    %v430 = vsel %vm422, %v412, %v428
    %431 = vst [vmem:[#allocation5] sm:$0xff] %v429
    %432 = vst [vmem:[#allocation5 + $0x8] sm:$0xff] %v430
    // Predicated region
    $region38: #{tpu_custom_call.1} parent=1 // pred_check
      _
    $region39: #{tpu_custom_call.1} parent=1 // pred_check_branch
      %434 = sbr.rel (0) target = $region41
    $region40: #{tpu_custom_call.1} parent=1 // pred_region
      %s436 = ssub.s32 256, 256
      %437 = vsyncadd [#allocation4], %s436
      %s438 = sshll.u32 [#allocation5], 4
      %s439 = int_to_ptr.vmem [resolvable:$true] %s438
      %444 = dma.vmem_to_hbm [thread:$0]  %s439, 256, %s8, [#allocation4], 128, 128, 8
    $region41: #{tpu_custom_call.1} parent=1 // pred_fallthru
      _
    // Predicated region
    $region42: #{tpu_custom_call.1} parent=1 // pred_check
      _
    $region43: #{tpu_custom_call.1} parent=1 // pred_check_branch
      %446 = sbr.rel (0) target = $region45
    $region44: #{tpu_custom_call.1} parent=1 // pred_region
      %447 = dma.done [#allocation4], 256
    $region45: #{tpu_custom_call.1} parent=1 // pred_fallthru
      _
    %448 = vsyncpa [#allocation3], 1
    %449 = vsyncpa [#allocation4], 1

</llo_original>
